<compile_context>
chip_gen: v7x
topology: tpu7x:2x2x1
jax: 0.10.0
libtpu: 0.0.40
codegen_flags: <defaults>
</compile_context>

<pallas_src>
import functools

import numpy as np

import jax
import jax.numpy as jnp
from jax.experimental import pallas as pl
from jax.experimental.pallas import tpu as pltpu


def _rm_loss_kernel(li_ref, si_ref, wi_ref, lj_ref, sj_ref, out_ref, *,
                    beta, tile_i, tile_j):
    bi = pl.program_id(0)
    bj = pl.program_id(1)

    @pl.when(bj == 0)
    def _init():
        out_ref[...] = jnp.zeros_like(out_ref)

    # A tile can only contain (i < j) pairs if its largest column index
    # exceeds its smallest row index; skip strictly-lower-triangular tiles.
    @pl.when(bj * tile_j + (tile_j - 1) > bi * tile_i)
    def _compute():
        li = li_ref[...].astype(jnp.float32)   # (TI, 1)  "pos" logits
        lj = lj_ref[...].astype(jnp.float32)   # (1, TJ)  "neg" logits
        si = si_ref[...]                       # (TI, 1)  int32 segment id
        sj = sj_ref[...]                       # (1, TJ)  int32 segment id
        wi = wi_ref[...]                       # (TI, 1)  f32 pair weight

        row = jax.lax.broadcasted_iota(jnp.int32, (tile_i, tile_j), 0) + bi * tile_i
        col = jax.lax.broadcasted_iota(jnp.int32, (tile_i, tile_j), 1) + bj * tile_j
        valid = (row < col) & (si == sj)       # (TI, TJ)

        d = li - lj                            # pos - neg, broadcast to (TI, TJ)
        # numerically-stable softplus(-d) == -logsigmoid(d)
        neg_logsig = jnp.maximum(-d, 0.0) + jnp.log(1.0 + jnp.exp(-jnp.abs(d)))
        l2 = 0.5 * (li * li + lj * lj)
        per_pair = wi * (neg_logsig + beta * l2)

        tile_sum = jnp.sum(jnp.where(valid, per_pair, 0.0))
        # Broadcast-accumulate: every element of the (1,8,128) partial block
        # carries the same running sum; the wrapper reads [:, 0, 0].
        out_ref[...] += tile_sum


def rm_loss(logits, cu_lengths=None, *, beta=0.001, reduction="mean"):
    """Pallas TPU implementation of RMLoss.forward (reduction='mean')."""
    if reduction != "mean":
        # TODO(synk): reduction='none' (per-segment loss vector) is not
        # implemented as a kernel output; only the default 'mean' path is.
        raise NotImplementedError("only reduction='mean' is supported")

    logits = jnp.asarray(logits).reshape(-1)
    n = int(logits.shape[0])
    if cu_lengths is None:
        cu_lengths = [0, n]
    cu = [int(c) for c in cu_lengths]
    num_groups = len(cu) - 1

    # O(N) host-side precompute: per-row segment id and per-pair weight
    # 1 / (num_groups * num_pairs(segment)).  Rows outside any segment (and
    # padding rows) get segment id -1 and weight 0 -> they never contribute.
    seg_np = np.full((n,), -1, dtype=np.int32)
    w_np = np.zeros((n,), dtype=np.float32)
    for g, (s, e) in enumerate(zip(cu[:-1], cu[1:])):
        k = e - s
        n_pairs = k * (k - 1) // 2
        seg_np[s:e] = g
        # TODO(synk): a segment with <2 rows gives NaN in torch (mean of an
        # empty tensor); here it simply contributes 0 to the mean.
        if n_pairs > 0:
            w_np[s:e] = 1.0 / (num_groups * n_pairs)

    # Pad N up to a multiple of 128 so both (rows->sublane) and
    # (cols->lane) layouts tile cleanly.
    n_pad = ((n + 127) // 128) * 128
    pad = n_pad - n
    logits_p = jnp.pad(logits, (0, pad))          # native dtype (bf16 ok)
    seg = jnp.pad(jnp.asarray(seg_np), (0, pad), constant_values=-1)
    wgt = jnp.pad(jnp.asarray(w_np), (0, pad))

    # Tile sizes: sublane tile multiple of 8, lane tile multiple of 128.
    # Working tile is at most 256x512 f32 (~512 KiB of temporaries) -> fits
    # comfortably under the default scoped VMEM on v5e/v6e/v7x.
    tile_i = 256 if n_pad % 256 == 0 else 128
    tile_j = 512 if n_pad % 512 == 0 else (256 if n_pad % 256 == 0 else 128)
    grid = (n_pad // tile_i, n_pad // tile_j)

    li = logits_p.reshape(n_pad, 1)   # rows -> sublane axis
    lj = logits_p.reshape(1, n_pad)   # cols -> lane axis
    si = seg.reshape(n_pad, 1)
    sj = seg.reshape(1, n_pad)
    wi = wgt.reshape(n_pad, 1)

    kernel = functools.partial(_rm_loss_kernel, beta=float(beta),
                               tile_i=tile_i, tile_j=tile_j)

    partials = pl.pallas_call(
        kernel,
        out_shape=jax.ShapeDtypeStruct((grid[0], 8, 128), jnp.float32),
        grid=grid,
        in_specs=[
            pl.BlockSpec((tile_i, 1), lambda bi, bj: (bi, 0)),   # li
            pl.BlockSpec((tile_i, 1), lambda bi, bj: (bi, 0)),   # si
            pl.BlockSpec((tile_i, 1), lambda bi, bj: (bi, 0)),   # wi
            pl.BlockSpec((1, tile_j), lambda bi, bj: (0, bj)),   # lj
            pl.BlockSpec((1, tile_j), lambda bi, bj: (0, bj)),   # sj
        ],
        out_specs=pl.BlockSpec((1, 8, 128), lambda bi, bj: (bi, 0, 0)),
        compiler_params=pltpu.CompilerParams(
            dimension_semantics=("parallel", "arbitrary")),
    )(li, si, wi, lj, sj)

    # Weights already carry 1/(num_groups * n_pairs), so the sum of the
    # per-row-block partials IS the final mean loss.
    return jnp.sum(partials[:, 0, 0])


def _reference(logits, cu_lengths, beta):
    # Pure-JAX mirror of the PyTorch forward.
    logits = jnp.asarray(logits, jnp.float32).reshape(-1)
    losses = []
    for s, e in zip(cu_lengths[:-1], cu_lengths[1:]):
        k = e - s
        ii, jj = np.triu_indices(k, k=1)        # same order as torch.combinations
        pos = logits[s + ii]
        neg = logits[s + jj]
        l2 = 0.5 * (pos ** 2 + neg ** 2)
        per = -jax.nn.log_sigmoid(pos - neg) + beta * l2
        losses.append(jnp.mean(per))
    return jnp.mean(jnp.stack(losses))


if __name__ == "__main__":
    key = jax.random.PRNGKey(0)
    n = 8
    logits = jax.random.normal(key, (n,), dtype=jnp.float32)

    # Two reward-model groups of 4 ranked completions each.
    cu_lengths = [0, 4, 8]
    beta = 0.001

    loss = rm_loss(logits, cu_lengths, beta=beta)
    loss = jax.block_until_ready(loss)
    ref = _reference(logits, cu_lengths, beta)
    assert jnp.allclose(loss, ref, rtol=1e-5, atol=1e-5), (loss, ref)

    # Default path: cu_lengths=None -> a single group over the whole batch.
    loss1 = jax.block_until_ready(rm_loss(logits, None, beta=beta))
    ref1 = _reference(logits, [0, n], beta)
    assert jnp.allclose(loss1, ref1, rtol=1e-5, atol=1e-5), (loss1, ref1)

    print("KERNEL_OK")
</pallas_src>

<mosaic_0001>
module attributes {stable_mosaic.version = 11 : i64} {
  func.func @_rm_loss_kernel(%arg0: i32, %arg1: i32, %arg2: memref<128x1xf32, #tpu.memory_space<vmem>>, %arg3: memref<128x1xi32, #tpu.memory_space<vmem>>, %arg4: memref<128x1xf32, #tpu.memory_space<vmem>>, %arg5: memref<1x128xf32, #tpu.memory_space<vmem>>, %arg6: memref<1x128xi32, #tpu.memory_space<vmem>>, %arg7: memref<1x8x128xf32, #tpu.memory_space<vmem>>) attributes {dimension_semantics = [#tpu.dimension_semantics<parallel>, #tpu.dimension_semantics<arbitrary>], iteration_bounds = array<i64: 1, 1>, scalar_prefetch = 0 : i64, scratch_operands = 0 : i64, tpu.core_type = #tpu.core_type<tc>, window_params = [{transform_indices = @transform_0, window_bounds = array<i64: 128, 1>}, {transform_indices = @transform_1, window_bounds = array<i64: 128, 1>}, {transform_indices = @transform_2, window_bounds = array<i64: 128, 1>}, {transform_indices = @transform_3, window_bounds = array<i64: 1, 128>}, {transform_indices = @transform_4, window_bounds = array<i64: 1, 128>}, {transform_indices = @transform_5, window_bounds = array<i64: 1, 8, 128>}]} {
    %c0_i32 = arith.constant 0 : i32
    %0 = arith.cmpi eq, %arg1, %c0_i32 : i32
    %1 = arith.extui %0 : i1 to i32
    %c0_i32_0 = arith.constant 0 : i32
    %2 = arith.cmpi ne, %1, %c0_i32_0 : i32
    scf.if %2 {
      %cst = arith.constant 0.000000e+00 : f32
      %9 = vector.broadcast %cst : f32 to vector<1x8x128xf32>
      %c0 = arith.constant 0 : index
      %c0_3 = arith.constant 0 : index
      %c0_4 = arith.constant 0 : index
      %10 = vector.load %arg7[%c0, %c0_3, %c0_4] : memref<1x8x128xf32, #tpu.memory_space<vmem>>, vector<1x8x128xf32>
      tpu.vector_store %arg7[%c0, %c0_3, %c0_4], %9 {strides = array<i32>} : memref<1x8x128xf32, #tpu.memory_space<vmem>>, vector<1x8x128xf32>,
    } else {
    }
    %c128_i32 = arith.constant 128 : i32
    %3 = arith.muli %arg1, %c128_i32 : i32
    %c127_i32 = arith.constant 127 : i32
    %4 = arith.addi %3, %c127_i32 : i32
    %c128_i32_1 = arith.constant 128 : i32
    %5 = arith.muli %arg0, %c128_i32_1 : i32
    %6 = arith.cmpi sgt, %4, %5 : i32
    %7 = arith.extui %6 : i1 to i32
    %c0_i32_2 = arith.constant 0 : i32
    %8 = arith.cmpi ne, %7, %c0_i32_2 : i32
    scf.if %8 {
      %c0 = arith.constant 0 : index
      %c0_3 = arith.constant 0 : index
      %9 = vector.load %arg2[%c0, %c0_3] : memref<128x1xf32, #tpu.memory_space<vmem>>, vector<128x1xf32>
      %c0_4 = arith.constant 0 : index
      %c0_5 = arith.constant 0 : index
      %10 = vector.load %arg5[%c0_4, %c0_5] : memref<1x128xf32, #tpu.memory_space<vmem>>, vector<1x128xf32>
      %c0_6 = arith.constant 0 : index
      %c0_7 = arith.constant 0 : index
      %11 = vector.load %arg3[%c0_6, %c0_7] : memref<128x1xi32, #tpu.memory_space<vmem>>, vector<128x1xi32>
      %c0_8 = arith.constant 0 : index
      %c0_9 = arith.constant 0 : index
      %12 = vector.load %arg6[%c0_8, %c0_9] : memref<1x128xi32, #tpu.memory_space<vmem>>, vector<1x128xi32>
      %c0_10 = arith.constant 0 : index
      %c0_11 = arith.constant 0 : index
      %13 = vector.load %arg4[%c0_10, %c0_11] : memref<128x1xf32, #tpu.memory_space<vmem>>, vector<128x1xf32>
      %14 = tpu.iota {dimensions = array<i32: 0>} : vector<128x128xi32>
      %c128_i32_12 = arith.constant 128 : i32
      %15 = arith.muli %arg0, %c128_i32_12 : i32
      %16 = vector.broadcast %15 : i32 to vector<128x128xi32>
      %17 = arith.addi %14, %16 : vector<128x128xi32>
      %18 = tpu.iota {dimensions = array<i32: 1>} : vector<128x128xi32>
      %c128_i32_13 = arith.constant 128 : i32
      %19 = arith.muli %arg1, %c128_i32_13 : i32
      %20 = vector.broadcast %19 : i32 to vector<128x128xi32>
      %21 = arith.addi %18, %20 : vector<128x128xi32>
      %22 = arith.cmpi slt, %17, %21 : vector<128x128xi32>
      %23 = vector.broadcast %11 : vector<128x1xi32> to vector<128x128xi32>
      %24 = vector.broadcast %12 : vector<1x128xi32> to vector<128x128xi32>
      %25 = arith.cmpi eq, %23, %24 : vector<128x128xi32>
      %26 = arith.andi %22, %25 : vector<128x128xi1>
      %27 = vector.broadcast %9 : vector<128x1xf32> to vector<128x128xf32>
      %28 = vector.broadcast %10 : vector<1x128xf32> to vector<128x128xf32>
      %29 = arith.subf %27, %28 : vector<128x128xf32>
      %cst = arith.constant 0.000000e+00 : f32
      %30 = vector.broadcast %cst : f32 to vector<128x128xf32>
      %31 = arith.subf %30, %29 : vector<128x128xf32>
      %cst_14 = arith.constant 0.000000e+00 : f32
      %32 = vector.broadcast %cst_14 : f32 to vector<128x128xf32>
      %33 = arith.maximumf %31, %32 : vector<128x128xf32>
      %34 = math.absf %29 : vector<128x128xf32>
      %cst_15 = arith.constant 0.000000e+00 : f32
      %35 = vector.broadcast %cst_15 : f32 to vector<128x128xf32>
      %36 = arith.subf %35, %34 : vector<128x128xf32>
      %37 = math.exp %36 : vector<128x128xf32>
      %cst_16 = arith.constant 1.000000e+00 : f32
      %38 = vector.broadcast %cst_16 : f32 to vector<128x128xf32>
      %39 = arith.addf %38, %37 : vector<128x128xf32>
      %40 = math.log %39 : vector<128x128xf32>
      %41 = arith.addf %33, %40 : vector<128x128xf32>
      %42 = arith.mulf %9, %9 : vector<128x1xf32>
      %43 = arith.mulf %10, %10 : vector<1x128xf32>
      %44 = vector.broadcast %42 : vector<128x1xf32> to vector<128x128xf32>
      %45 = vector.broadcast %43 : vector<1x128xf32> to vector<128x128xf32>
      %46 = arith.addf %44, %45 : vector<128x128xf32>
      %cst_17 = arith.constant 5.000000e-01 : f32
      %47 = vector.broadcast %cst_17 : f32 to vector<128x128xf32>
      %48 = arith.mulf %47, %46 : vector<128x128xf32>
      %cst_18 = arith.constant 1.000000e-03 : f32
      %49 = vector.broadcast %cst_18 : f32 to vector<128x128xf32>
      %50 = arith.mulf %49, %48 : vector<128x128xf32>
      %51 = arith.addf %41, %50 : vector<128x128xf32>
      %52 = vector.broadcast %13 : vector<128x1xf32> to vector<128x128xf32>
      %53 = arith.mulf %52, %51 : vector<128x128xf32>
      %cst_19 = arith.constant 0.000000e+00 : f32
      %54 = vector.broadcast %cst_19 : f32 to vector<128x128xf32>
      %55 = arith.select %26, %53, %54 : vector<128x128xi1>, vector<128x128xf32>
      %56 = vector.shape_cast %55 : vector<128x128xf32> to vector<1x128x128xf32>
      %cst_20 = arith.constant dense<0.000000e+00> : vector<1xf32>
      %57 = vector.multi_reduction <add>, %56, %cst_20 [1, 2] : vector<1x128x128xf32> to vector<1xf32>
      %58 = vector.shape_cast %57 : vector<1xf32> to vector<1x1x1xf32>
      %59 = vector.extract %58[0, 0, 0] : f32 from vector<1x1x1xf32>
      %c0_21 = arith.constant 0 : index
      %c0_22 = arith.constant 0 : index
      %c0_23 = arith.constant 0 : index
      %60 = vector.load %arg7[%c0_21, %c0_22, %c0_23] : memref<1x8x128xf32, #tpu.memory_space<vmem>>, vector<1x8x128xf32>
      %61 = vector.broadcast %59 : f32 to vector<1x8x128xf32>
      %62 = arith.addf %60, %61 : vector<1x8x128xf32>
      %c0_24 = arith.constant 0 : index
      %c0_25 = arith.constant 0 : index
      %c0_26 = arith.constant 0 : index
      %63 = vector.load %arg7[%c0_24, %c0_25, %c0_26] : memref<1x8x128xf32, #tpu.memory_space<vmem>>, vector<1x8x128xf32>
      tpu.vector_store %arg7[%c0_24, %c0_25, %c0_26], %62 {strides = array<i32>} : memref<1x8x128xf32, #tpu.memory_space<vmem>>, vector<1x8x128xf32>,
    } else {
    }
    return
  }
  func.func @transform_0(%arg0: i32, %arg1: i32) -> (i32, i32) {
    %c0_i32 = arith.constant 0 : i32
    %c0_i32_0 = arith.constant 0 : i32
    return %arg0, %c0_i32 : i32, i32
  }
  func.func @transform_1(%arg0: i32, %arg1: i32) -> (i32, i32) {
    %c0_i32 = arith.constant 0 : i32
    %c0_i32_0 = arith.constant 0 : i32
    return %arg0, %c0_i32 : i32, i32
  }
  func.func @transform_2(%arg0: i32, %arg1: i32) -> (i32, i32) {
    %c0_i32 = arith.constant 0 : i32
    %c0_i32_0 = arith.constant 0 : i32
    return %arg0, %c0_i32 : i32, i32
  }
  func.func @transform_3(%arg0: i32, %arg1: i32) -> (i32, i32) {
    %c0_i32 = arith.constant 0 : i32
    %c0_i32_0 = arith.constant 0 : i32
    return %c0_i32, %arg1 : i32, i32
  }
  func.func @transform_4(%arg0: i32, %arg1: i32) -> (i32, i32) {
    %c0_i32 = arith.constant 0 : i32
    %c0_i32_0 = arith.constant 0 : i32
    return %c0_i32, %arg1 : i32, i32
  }
  func.func @transform_5(%arg0: i32, %arg1: i32) -> (i32, i32, i32) {
    %c0_i32 = arith.constant 0 : i32
    %c0_i32_0 = arith.constant 0 : i32
    %c0_i32_1 = arith.constant 0 : i32
    return %arg0, %c0_i32, %c0_i32_0 : i32, i32, i32
  }
}

</mosaic_0001>

<llo_original>
// kernel: tpu_custom_call.1
$region0: #{tpu_custom_call.1}
  #allocation0 [shape = 'u32[]', space=smem, size = 0x4, offset = 0x4, fixed_abs, tag = 'smem constant byte address 0x4 - core index']
  #allocation1 [shape = 'u32[144,128]{1,0:T(1,128)}', space=vmem, size = 0x12000, scoped, tag = 'internal scratch']
  %s0 = inlined_call_operand.vmem [shape: f32[128,1], index: 0, kind: input, shape index: {}]
  %s1 = inlined_call_operand.vmem [shape: s32[128,1], index: 1, kind: input, shape index: {}]
  %s2 = inlined_call_operand.vmem [shape: f32[128,1], index: 2, kind: input, shape index: {}]
  %s3 = inlined_call_operand.vmem [shape: f32[1,128], index: 3, kind: input, shape index: {}]
  %s4 = inlined_call_operand.vmem [shape: s32[1,128], index: 4, kind: input, shape index: {}]
  %s5 = inlined_call_operand.hbm [shape: f32[1,8,128], index: 5, kind: output, shape index: {}]
  %s6 = sld [smem:[#allocation0]]
  $region38: #{tpu_custom_call.1} parent=0
    _
  %s8 = ssub.s32 1, %s6
  %s9 = scalar_select 0, %s8, %s6
  $region1: #{tpu_custom_call.1} parent=0
    #allocation2 [shape = 'u8[4096]{0}', space=vmem, size = 0x1000, scoped, tag = 'output window, operand 0, single buffered']
    #allocation3 [shape = 's32[1]{0}', space=sflag, size = 0x4, scoped, tag = 'scoped memory for tpu_custom_call.1']
    %10 = vsyncpa [#allocation3], 0
    // Predicated region
    $region2: #{tpu_custom_call.1} parent=1 // pred_check
      _
    $region3: #{tpu_custom_call.1} parent=1 // pred_check_branch
      %12 = sbr.rel (0) target = $region5
    $region4: #{tpu_custom_call.1} parent=1 // pred_region
      _
    $region5: #{tpu_custom_call.1} parent=1 // pred_fallthru
      _
    // Predicated region
    $region6: #{tpu_custom_call.1} parent=1 // pred_check
      _
    $region7: #{tpu_custom_call.1} parent=1 // pred_check_branch
      %14 = sbr.rel (0) target = $region9
    $region8: #{tpu_custom_call.1} parent=1 // pred_region
      _
    $region9: #{tpu_custom_call.1} parent=1 // pred_fallthru
      _
    // Predicated region
    $region10: #{tpu_custom_call.1} parent=1 // pred_check
      _
    $region11: #{tpu_custom_call.1} parent=1 // pred_check_branch
      %16 = sbr.rel (0) target = $region13
    $region12: #{tpu_custom_call.1} parent=1 // pred_region
      _
    $region13: #{tpu_custom_call.1} parent=1 // pred_fallthru
      _
    // Predicated region
    $region14: #{tpu_custom_call.1} parent=1 // pred_check
      _
    $region15: #{tpu_custom_call.1} parent=1 // pred_check_branch
      %18 = sbr.rel (0) target = $region17
    $region16: #{tpu_custom_call.1} parent=1 // pred_region
      _
    $region17: #{tpu_custom_call.1} parent=1 // pred_fallthru
      _
    // Predicated region
    $region18: #{tpu_custom_call.1} parent=1 // pred_check
      _
    $region19: #{tpu_custom_call.1} parent=1 // pred_check_branch
      %20 = sbr.rel (0) target = $region21
    $region20: #{tpu_custom_call.1} parent=1 // pred_region
      _
    $region21: #{tpu_custom_call.1} parent=1 // pred_fallthru
      _
    %p21 = scmp.eq.s32.totalorder 0, 0
    // Predicated region
    $region22: #{tpu_custom_call.1} parent=1 // pred_check
      %p22 = pneg %p21
    $region23: #{tpu_custom_call.1} parent=1 // pred_check_branch
      %24 = sbr.rel (%p22) target = $region25
    $region24: #{tpu_custom_call.1} parent=1 // pred_region
      %25 = vst [vmem:[#allocation2] sm:$0xff] 0.0
    $region25: #{tpu_custom_call.1} parent=1 // pred_fallthru
      _
    %s26 = smul.u32 0, 128
    %s27 = sadd.s32 %s26, 127
    %s28 = smul.u32 0, 128
    %p29 = scmp.gt.s32.totalorder %s27, %s28
    // Predicated region
    $region26: #{tpu_custom_call.1} parent=1 // pred_check
      %p30 = pneg %p29
    $region27: #{tpu_custom_call.1} parent=1 // pred_check_branch
      %32 = sbr.rel (%p30) target = $region29
    $region28: #{tpu_custom_call.1} parent=1 // pred_region
      %v33 = vld [vmem:[%s0] sm:$0xff]
      %v34 = vld [vmem:[%s0 + $0x8] sm:$0xff]
      %v35 = vld [vmem:[%s0 + $0x10] sm:$0xff]
      %v36 = vld [vmem:[%s0 + $0x18] sm:$0xff]
      %v37 = vld [vmem:[%s0 + $0x20] sm:$0xff]
      %v38 = vld [vmem:[%s0 + $0x28] sm:$0xff]
      %v39 = vld [vmem:[%s0 + $0x30] sm:$0xff]
      %v40 = vld [vmem:[%s0 + $0x38] sm:$0xff]
      %v41 = vld [vmem:[%s0 + $0x40] sm:$0xff]
      %v42 = vld [vmem:[%s0 + $0x48] sm:$0xff]
      %v43 = vld [vmem:[%s0 + $0x50] sm:$0xff]
      %v44 = vld [vmem:[%s0 + $0x58] sm:$0xff]
      %v45 = vld [vmem:[%s0 + $0x60] sm:$0xff]
      %v46 = vld [vmem:[%s0 + $0x68] sm:$0xff]
      %v47 = vld [vmem:[%s0 + $0x70] sm:$0xff]
      %v48 = vld [vmem:[%s0 + $0x78] sm:$0xff]
      %v49 = vld [vmem:[%s3] sm:$0x1]
      %v50 = vld [vmem:[%s1] sm:$0xff]
      %v51 = vld [vmem:[%s1 + $0x8] sm:$0xff]
      %v52 = vld [vmem:[%s1 + $0x10] sm:$0xff]
      %v53 = vld [vmem:[%s1 + $0x18] sm:$0xff]
      %v54 = vld [vmem:[%s1 + $0x20] sm:$0xff]
      %v55 = vld [vmem:[%s1 + $0x28] sm:$0xff]
      %v56 = vld [vmem:[%s1 + $0x30] sm:$0xff]
      %v57 = vld [vmem:[%s1 + $0x38] sm:$0xff]
      %v58 = vld [vmem:[%s1 + $0x40] sm:$0xff]
      %v59 = vld [vmem:[%s1 + $0x48] sm:$0xff]
      %v60 = vld [vmem:[%s1 + $0x50] sm:$0xff]
      %v61 = vld [vmem:[%s1 + $0x58] sm:$0xff]
      %v62 = vld [vmem:[%s1 + $0x60] sm:$0xff]
      %v63 = vld [vmem:[%s1 + $0x68] sm:$0xff]
      %v64 = vld [vmem:[%s1 + $0x70] sm:$0xff]
      %v65 = vld [vmem:[%s1 + $0x78] sm:$0xff]
      %v66 = vld [vmem:[%s4] sm:$0x1]
      %v67 = vld [vmem:[%s2] sm:$0xff]
      %v68 = vld [vmem:[%s2 + $0x8] sm:$0xff]
      %v69 = vld [vmem:[%s2 + $0x10] sm:$0xff]
      %v70 = vld [vmem:[%s2 + $0x18] sm:$0xff]
      %v71 = vld [vmem:[%s2 + $0x20] sm:$0xff]
      %v72 = vld [vmem:[%s2 + $0x28] sm:$0xff]
      %v73 = vld [vmem:[%s2 + $0x30] sm:$0xff]
      %v74 = vld [vmem:[%s2 + $0x38] sm:$0xff]
      %v75 = vld [vmem:[%s2 + $0x40] sm:$0xff]
      %v76 = vld [vmem:[%s2 + $0x48] sm:$0xff]
      %v77 = vld [vmem:[%s2 + $0x50] sm:$0xff]
      %v78 = vld [vmem:[%s2 + $0x58] sm:$0xff]
      %v79 = vld [vmem:[%s2 + $0x60] sm:$0xff]
      %v80 = vld [vmem:[%s2 + $0x68] sm:$0xff]
      %v81 = vld [vmem:[%s2 + $0x70] sm:$0xff]
      %v82 = vld [vmem:[%s2 + $0x78] sm:$0xff]
      %v83 = vlaneseq
      %v84 = vshrl.u32 %v83, 7
      %v85 = vadd.s32 %v84, 8
      %v86 = vadd.s32 %v84, 16
      %v87 = vadd.s32 %v84, 24
      %v88 = vadd.s32 %v84, 32
      %v89 = vadd.s32 %v84, 40
      %v90 = vadd.s32 %v84, 48
      %v91 = vadd.s32 %v84, 56
      %v92 = vadd.s32 %v84, 64
      %v93 = vadd.s32 %v84, 72
      %v94 = vadd.s32 %v84, 80
      %v95 = vadd.s32 %v84, 88
      %v96 = vadd.s32 %v84, 96
      %v97 = vadd.s32 %v84, 104
      %v98 = vadd.s32 %v84, 112
      %v99 = vadd.s32 %v84, 120
      %v100 = vstv %s28
      %v101 = vadd.s32 %v84, %v100
      %v102 = vadd.s32 %v85, %v100
      %v103 = vadd.s32 %v86, %v100
      %v104 = vadd.s32 %v87, %v100
      %v105 = vadd.s32 %v88, %v100
      %v106 = vadd.s32 %v89, %v100
      %v107 = vadd.s32 %v90, %v100
      %v108 = vadd.s32 %v91, %v100
      %v109 = vadd.s32 %v92, %v100
      %v110 = vadd.s32 %v93, %v100
      %v111 = vadd.s32 %v94, %v100
      %v112 = vadd.s32 %v95, %v100
      %v113 = vadd.s32 %v96, %v100
      %v114 = vadd.s32 %v97, %v100
      %v115 = vadd.s32 %v98, %v100
      %v116 = vadd.s32 %v99, %v100
      %v117 = vlaneseq
      %v118 = vand.u32 %v117, 127
      %v119 = vstv %s26
      %v120 = vadd.s32 %v118, %v119
      %vm121 = vcmp.lt.s32.totalorder %v101, %v120
      %vm122 = vcmp.lt.s32.totalorder %v102, %v120
      %vm123 = vcmp.lt.s32.totalorder %v103, %v120
      %vm124 = vcmp.lt.s32.totalorder %v104, %v120
      %vm125 = vcmp.lt.s32.totalorder %v105, %v120
      %vm126 = vcmp.lt.s32.totalorder %v106, %v120
      %vm127 = vcmp.lt.s32.totalorder %v107, %v120
      %vm128 = vcmp.lt.s32.totalorder %v108, %v120
      %vm129 = vcmp.lt.s32.totalorder %v109, %v120
      %vm130 = vcmp.lt.s32.totalorder %v110, %v120
      %vm131 = vcmp.lt.s32.totalorder %v111, %v120
      %vm132 = vcmp.lt.s32.totalorder %v112, %v120
      %vm133 = vcmp.lt.s32.totalorder %v113, %v120
      %vm134 = vcmp.lt.s32.totalorder %v114, %v120
      %vm135 = vcmp.lt.s32.totalorder %v115, %v120
      %vm136 = vcmp.lt.s32.totalorder %v116, %v120
      %137 = vset.pattern.permute.xlu0 0
      %138 = vperm.xlu0 %137, %v50
      %v139 = vpop.permute.xlu0 %138
      %140 = vset.pattern.permute.xlu0 0
      %141 = vperm.xlu0 %140, %v51
      %v142 = vpop.permute.xlu0 %141
      %143 = vset.pattern.permute.xlu0 0
      %144 = vperm.xlu0 %143, %v52
      %v145 = vpop.permute.xlu0 %144
      %146 = vset.pattern.permute.xlu0 0
      %147 = vperm.xlu0 %146, %v53
      %v148 = vpop.permute.xlu0 %147
      %149 = vset.pattern.permute.xlu0 0
      %150 = vperm.xlu0 %149, %v54
      %v151 = vpop.permute.xlu0 %150
      %152 = vset.pattern.permute.xlu0 0
      %153 = vperm.xlu0 %152, %v55
      %v154 = vpop.permute.xlu0 %153
      %155 = vset.pattern.permute.xlu0 0
      %156 = vperm.xlu0 %155, %v56
      %v157 = vpop.permute.xlu0 %156
      %158 = vset.pattern.permute.xlu0 0
      %159 = vperm.xlu0 %158, %v57
      %v160 = vpop.permute.xlu0 %159
      %161 = vset.pattern.permute.xlu0 0
      %162 = vperm.xlu0 %161, %v58
      %v163 = vpop.permute.xlu0 %162
      %164 = vset.pattern.permute.xlu0 0
      %165 = vperm.xlu0 %164, %v59
      %v166 = vpop.permute.xlu0 %165
      %167 = vset.pattern.permute.xlu0 0
      %168 = vperm.xlu0 %167, %v60
      %v169 = vpop.permute.xlu0 %168
      %170 = vset.pattern.permute.xlu0 0
      %171 = vperm.xlu0 %170, %v61
      %v172 = vpop.permute.xlu0 %171
      %173 = vset.pattern.permute.xlu0 0
      %174 = vperm.xlu0 %173, %v62
      %v175 = vpop.permute.xlu0 %174
      %176 = vset.pattern.permute.xlu0 0
      %177 = vperm.xlu0 %176, %v63
      %v178 = vpop.permute.xlu0 %177
      %179 = vset.pattern.permute.xlu0 0
      %180 = vperm.xlu0 %179, %v64
      %v181 = vpop.permute.xlu0 %180
      %182 = vset.pattern.permute.xlu0 0
      %183 = vperm.xlu0 %182, %v65
      %v184 = vpop.permute.xlu0 %183
      %v185 = vlaneseq
      %v186 = vshrl.u32 %v185, 7
      %v187 = vsub.s32 0, %v186
      %v188 = vrot.slane %v66, %v187
      %vm189 = vcmp.eq.s32.totalorder %v139, %v188
      %vm190 = vcmp.eq.s32.totalorder %v142, %v188
      %vm191 = vcmp.eq.s32.totalorder %v145, %v188
      %vm192 = vcmp.eq.s32.totalorder %v148, %v188
      %vm193 = vcmp.eq.s32.totalorder %v151, %v188
      %vm194 = vcmp.eq.s32.totalorder %v154, %v188
      %vm195 = vcmp.eq.s32.totalorder %v157, %v188
      %vm196 = vcmp.eq.s32.totalorder %v160, %v188
      %vm197 = vcmp.eq.s32.totalorder %v163, %v188
      %vm198 = vcmp.eq.s32.totalorder %v166, %v188
      %vm199 = vcmp.eq.s32.totalorder %v169, %v188
      %vm200 = vcmp.eq.s32.totalorder %v172, %v188
      %vm201 = vcmp.eq.s32.totalorder %v175, %v188
      %vm202 = vcmp.eq.s32.totalorder %v178, %v188
      %vm203 = vcmp.eq.s32.totalorder %v181, %v188
      %vm204 = vcmp.eq.s32.totalorder %v184, %v188
      %vm205 = vmand %vm121, %vm189
      %vm206 = vmand %vm122, %vm190
      %vm207 = vmand %vm123, %vm191
      %vm208 = vmand %vm124, %vm192
      %vm209 = vmand %vm125, %vm193
      %vm210 = vmand %vm126, %vm194
      %vm211 = vmand %vm127, %vm195
      %vm212 = vmand %vm128, %vm196
      %vm213 = vmand %vm129, %vm197
      %vm214 = vmand %vm130, %vm198
      %vm215 = vmand %vm131, %vm199
      %vm216 = vmand %vm132, %vm200
      %vm217 = vmand %vm133, %vm201
      %vm218 = vmand %vm134, %vm202
      %vm219 = vmand %vm135, %vm203
      %vm220 = vmand %vm136, %vm204
      %222 = vset.pattern.permute.xlu0 0
      %223 = vperm.xlu0 %222, %v33
      %v224 = vpop.permute.xlu0 %223
      %227 = vset.pattern.permute.xlu0 0
      %228 = vperm.xlu0 %227, %v34
      %v229 = vpop.permute.xlu0 %228
      %232 = vset.pattern.permute.xlu0 0
      %233 = vperm.xlu0 %232, %v35
      %v234 = vpop.permute.xlu0 %233
      %237 = vset.pattern.permute.xlu0 0
      %238 = vperm.xlu0 %237, %v36
      %v239 = vpop.permute.xlu0 %238
      %242 = vset.pattern.permute.xlu0 0
      %243 = vperm.xlu0 %242, %v37
      %v244 = vpop.permute.xlu0 %243
      %247 = vset.pattern.permute.xlu0 0
      %248 = vperm.xlu0 %247, %v38
      %v249 = vpop.permute.xlu0 %248
      %252 = vset.pattern.permute.xlu0 0
      %253 = vperm.xlu0 %252, %v39
      %v254 = vpop.permute.xlu0 %253
      %257 = vset.pattern.permute.xlu0 0
      %258 = vperm.xlu0 %257, %v40
      %v259 = vpop.permute.xlu0 %258
      %262 = vset.pattern.permute.xlu0 0
      %263 = vperm.xlu0 %262, %v41
      %v264 = vpop.permute.xlu0 %263
      %267 = vset.pattern.permute.xlu0 0
      %268 = vperm.xlu0 %267, %v42
      %v269 = vpop.permute.xlu0 %268
      %272 = vset.pattern.permute.xlu0 0
      %273 = vperm.xlu0 %272, %v43
      %v274 = vpop.permute.xlu0 %273
      %277 = vset.pattern.permute.xlu0 0
      %278 = vperm.xlu0 %277, %v44
      %v279 = vpop.permute.xlu0 %278
      %282 = vset.pattern.permute.xlu0 0
      %283 = vperm.xlu0 %282, %v45
      %v284 = vpop.permute.xlu0 %283
      %287 = vset.pattern.permute.xlu0 0
      %288 = vperm.xlu0 %287, %v46
      %v289 = vpop.permute.xlu0 %288
      %292 = vset.pattern.permute.xlu0 0
      %293 = vperm.xlu0 %292, %v47
      %v294 = vpop.permute.xlu0 %293
      %297 = vset.pattern.permute.xlu0 0
      %298 = vperm.xlu0 %297, %v48
      %v299 = vpop.permute.xlu0 %298
      %v302 = vlaneseq
      %v303 = vshrl.u32 %v302, 7
      %v304 = vsub.s32 0, %v303
      %v305 = vrot.slane %v49, %v304
      %v307 = vsub.f32 %v224, %v305
      %v308 = vsub.f32 %v229, %v305
      %v309 = vsub.f32 %v234, %v305
      %v310 = vsub.f32 %v239, %v305
      %v311 = vsub.f32 %v244, %v305
      %v312 = vsub.f32 %v249, %v305
      %v313 = vsub.f32 %v254, %v305
      %v314 = vsub.f32 %v259, %v305
      %v315 = vsub.f32 %v264, %v305
      %v316 = vsub.f32 %v269, %v305
      %v317 = vsub.f32 %v274, %v305
      %v318 = vsub.f32 %v279, %v305
      %v319 = vsub.f32 %v284, %v305
      %v320 = vsub.f32 %v289, %v305
      %v321 = vsub.f32 %v294, %v305
      %v322 = vsub.f32 %v299, %v305
      %v323 = vsub.f32 0.0, %v307
      %v324 = vsub.f32 0.0, %v308
      %v325 = vsub.f32 0.0, %v309
      %v326 = vsub.f32 0.0, %v310
      %v327 = vsub.f32 0.0, %v311
      %v328 = vsub.f32 0.0, %v312
      %v329 = vsub.f32 0.0, %v313
      %v330 = vsub.f32 0.0, %v314
      %v331 = vsub.f32 0.0, %v315
      %v332 = vsub.f32 0.0, %v316
      %v333 = vsub.f32 0.0, %v317
      %v334 = vsub.f32 0.0, %v318
      %v335 = vsub.f32 0.0, %v319
      %v336 = vsub.f32 0.0, %v320
      %v337 = vsub.f32 0.0, %v321
      %v338 = vsub.f32 0.0, %v322
      %v339 = vmax.f32 %v323, 0.0
      %v340 = vmax.f32 %v324, 0.0
      %v341 = vmax.f32 %v325, 0.0
      %v342 = vmax.f32 %v326, 0.0
      %v343 = vmax.f32 %v327, 0.0
      %v344 = vmax.f32 %v328, 0.0
      %v345 = vmax.f32 %v329, 0.0
      %v346 = vmax.f32 %v330, 0.0
      %v347 = vmax.f32 %v331, 0.0
      %v348 = vmax.f32 %v332, 0.0
      %v349 = vmax.f32 %v333, 0.0
      %v350 = vmax.f32 %v334, 0.0
      %v351 = vmax.f32 %v335, 0.0
      %v352 = vmax.f32 %v336, 0.0
      %v353 = vmax.f32 %v337, 0.0
      %v354 = vmax.f32 %v338, 0.0
      %v355 = vand.u32 2147483647, %v307
      %v356 = vand.u32 2147483647, %v308
      %v357 = vand.u32 2147483647, %v309
      %v358 = vand.u32 2147483647, %v310
      %v359 = vand.u32 2147483647, %v311
      %v360 = vand.u32 2147483647, %v312
      %v361 = vand.u32 2147483647, %v313
      %v362 = vand.u32 2147483647, %v314
      %v363 = vand.u32 2147483647, %v315
      %v364 = vand.u32 2147483647, %v316
      %v365 = vand.u32 2147483647, %v317
      %v366 = vand.u32 2147483647, %v318
      %v367 = vand.u32 2147483647, %v319
      %v368 = vand.u32 2147483647, %v320
      %v369 = vand.u32 2147483647, %v321
      %v370 = vand.u32 2147483647, %v322
      %v371 = vsub.f32 0.0, %v355
      %v372 = vsub.f32 0.0, %v356
      %v373 = vsub.f32 0.0, %v357
      %v374 = vsub.f32 0.0, %v358
      %v375 = vsub.f32 0.0, %v359
      %v376 = vsub.f32 0.0, %v360
      %v377 = vsub.f32 0.0, %v361
      %v378 = vsub.f32 0.0, %v362
      %v379 = vsub.f32 0.0, %v363
      %v380 = vsub.f32 0.0, %v364
      %v381 = vsub.f32 0.0, %v365
      %v382 = vsub.f32 0.0, %v366
      %v383 = vsub.f32 0.0, %v367
      %v384 = vsub.f32 0.0, %v368
      %v385 = vsub.f32 0.0, %v369
      %v386 = vsub.f32 0.0, %v370
      %v387 = vmul.f32 %v371, 1.442695
      %v388 = vpow.pop %v387
      %v389 = vmul.f32 %v372, 1.442695
      %v390 = vpow.pop %v389
      %v391 = vmul.f32 %v373, 1.442695
      %v392 = vpow.pop %v391
      %v393 = vmul.f32 %v374, 1.442695
      %v394 = vpow.pop %v393
      %v395 = vmul.f32 %v375, 1.442695
      %v396 = vpow.pop %v395
      %v397 = vmul.f32 %v376, 1.442695
      %v398 = vpow.pop %v397
      %v399 = vmul.f32 %v377, 1.442695
      %v400 = vpow.pop %v399
      %v401 = vmul.f32 %v378, 1.442695
      %v402 = vpow.pop %v401
      %v403 = vmul.f32 %v379, 1.442695
      %v404 = vpow.pop %v403
      %v405 = vmul.f32 %v380, 1.442695
      %v406 = vpow.pop %v405
      %v407 = vmul.f32 %v381, 1.442695
      %v408 = vpow.pop %v407
      %v409 = vmul.f32 %v382, 1.442695
      %v410 = vpow.pop %v409
      %v411 = vmul.f32 %v383, 1.442695
      %v412 = vpow.pop %v411
      %v413 = vmul.f32 %v384, 1.442695
      %v414 = vpow.pop %v413
      %v415 = vmul.f32 %v385, 1.442695
      %v416 = vpow.pop %v415
      %v417 = vmul.f32 %v386, 1.442695
      %v418 = vpow.pop %v417
      %v419 = vadd.f32 %v388, 1.0
      %v420 = vadd.f32 %v390, 1.0
      %v421 = vadd.f32 %v392, 1.0
      %v422 = vadd.f32 %v394, 1.0
      %v423 = vadd.f32 %v396, 1.0
      %v424 = vadd.f32 %v398, 1.0
      %v425 = vadd.f32 %v400, 1.0
      %v426 = vadd.f32 %v402, 1.0
      %v427 = vadd.f32 %v404, 1.0
      %v428 = vadd.f32 %v406, 1.0
      %v429 = vadd.f32 %v408, 1.0
      %v430 = vadd.f32 %v410, 1.0
      %v431 = vadd.f32 %v412, 1.0
      %v432 = vadd.f32 %v414, 1.0
      %v433 = vadd.f32 %v416, 1.0
      %v434 = vadd.f32 %v418, 1.0
      %v435 = vlog2.pop %v419
      %v436 = vmul.f32 %v435, 0.6931472
      %v437 = vlog2.pop %v420
      %v438 = vmul.f32 %v437, 0.6931472
      %v439 = vlog2.pop %v421
      %v440 = vmul.f32 %v439, 0.6931472
      %v441 = vlog2.pop %v422
      %v442 = vmul.f32 %v441, 0.6931472
      %v443 = vlog2.pop %v423
      %v444 = vmul.f32 %v443, 0.6931472
      %v445 = vlog2.pop %v424
      %v446 = vmul.f32 %v445, 0.6931472
      %v447 = vlog2.pop %v425
      %v448 = vmul.f32 %v447, 0.6931472
      %v449 = vlog2.pop %v426
      %v450 = vmul.f32 %v449, 0.6931472
      %v451 = vlog2.pop %v427
      %v452 = vmul.f32 %v451, 0.6931472
      %v453 = vlog2.pop %v428
      %v454 = vmul.f32 %v453, 0.6931472
      %v455 = vlog2.pop %v429
      %v456 = vmul.f32 %v455, 0.6931472
      %v457 = vlog2.pop %v430
      %v458 = vmul.f32 %v457, 0.6931472
      %v459 = vlog2.pop %v431
      %v460 = vmul.f32 %v459, 0.6931472
      %v461 = vlog2.pop %v432
      %v462 = vmul.f32 %v461, 0.6931472
      %v463 = vlog2.pop %v433
      %v464 = vmul.f32 %v463, 0.6931472
      %v465 = vlog2.pop %v434
      %v466 = vmul.f32 %v465, 0.6931472
      %v467 = vadd.f32 %v339, %v436
      %v468 = vadd.f32 %v340, %v438
      %v469 = vadd.f32 %v341, %v440
      %v470 = vadd.f32 %v342, %v442
      %v471 = vadd.f32 %v343, %v444
      %v472 = vadd.f32 %v344, %v446
      %v473 = vadd.f32 %v345, %v448
      %v474 = vadd.f32 %v346, %v450
      %v475 = vadd.f32 %v347, %v452
      %v476 = vadd.f32 %v348, %v454
      %v477 = vadd.f32 %v349, %v456
      %v478 = vadd.f32 %v350, %v458
      %v479 = vadd.f32 %v351, %v460
      %v480 = vadd.f32 %v352, %v462
      %v481 = vadd.f32 %v353, %v464
      %v482 = vadd.f32 %v354, %v466
      %v483 = vmul.f32 %v33, %v33
      %v484 = vmul.f32 %v34, %v34
      %v485 = vmul.f32 %v35, %v35
      %v486 = vmul.f32 %v36, %v36
      %v487 = vmul.f32 %v37, %v37
      %v488 = vmul.f32 %v38, %v38
      %v489 = vmul.f32 %v39, %v39
      %v490 = vmul.f32 %v40, %v40
      %v491 = vmul.f32 %v41, %v41
      %v492 = vmul.f32 %v42, %v42
      %v493 = vmul.f32 %v43, %v43
      %v494 = vmul.f32 %v44, %v44
      %v495 = vmul.f32 %v45, %v45
      %v496 = vmul.f32 %v46, %v46
      %v497 = vmul.f32 %v47, %v47
      %v498 = vmul.f32 %v48, %v48
      %v499 = vmul.f32 %v49, %v49
      %501 = vset.pattern.permute.xlu0 0
      %502 = vperm.xlu0 %501, %v483
      %v503 = vpop.permute.xlu0 %502
      %506 = vset.pattern.permute.xlu0 0
      %507 = vperm.xlu0 %506, %v484
      %v508 = vpop.permute.xlu0 %507
      %511 = vset.pattern.permute.xlu0 0
      %512 = vperm.xlu0 %511, %v485
      %v513 = vpop.permute.xlu0 %512
      %516 = vset.pattern.permute.xlu0 0
      %517 = vperm.xlu0 %516, %v486
      %v518 = vpop.permute.xlu0 %517
      %521 = vset.pattern.permute.xlu0 0
      %522 = vperm.xlu0 %521, %v487
      %v523 = vpop.permute.xlu0 %522
      %526 = vset.pattern.permute.xlu0 0
      %527 = vperm.xlu0 %526, %v488
      %v528 = vpop.permute.xlu0 %527
      %531 = vset.pattern.permute.xlu0 0
      %532 = vperm.xlu0 %531, %v489
      %v533 = vpop.permute.xlu0 %532
      %536 = vset.pattern.permute.xlu0 0
      %537 = vperm.xlu0 %536, %v490
      %v538 = vpop.permute.xlu0 %537
      %541 = vset.pattern.permute.xlu0 0
      %542 = vperm.xlu0 %541, %v491
      %v543 = vpop.permute.xlu0 %542
      %546 = vset.pattern.permute.xlu0 0
      %547 = vperm.xlu0 %546, %v492
      %v548 = vpop.permute.xlu0 %547
      %551 = vset.pattern.permute.xlu0 0
      %552 = vperm.xlu0 %551, %v493
      %v553 = vpop.permute.xlu0 %552
      %556 = vset.pattern.permute.xlu0 0
      %557 = vperm.xlu0 %556, %v494
      %v558 = vpop.permute.xlu0 %557
      %561 = vset.pattern.permute.xlu0 0
      %562 = vperm.xlu0 %561, %v495
      %v563 = vpop.permute.xlu0 %562
      %566 = vset.pattern.permute.xlu0 0
      %567 = vperm.xlu0 %566, %v496
      %v568 = vpop.permute.xlu0 %567
      %571 = vset.pattern.permute.xlu0 0
      %572 = vperm.xlu0 %571, %v497
      %v573 = vpop.permute.xlu0 %572
      %576 = vset.pattern.permute.xlu0 0
      %577 = vperm.xlu0 %576, %v498
      %v578 = vpop.permute.xlu0 %577
      %v581 = vlaneseq
      %v582 = vshrl.u32 %v581, 7
      %v583 = vsub.s32 0, %v582
      %v584 = vrot.slane %v499, %v583
      %v586 = vadd.f32 %v503, %v584
      %v587 = vadd.f32 %v508, %v584
      %v588 = vadd.f32 %v513, %v584
      %v589 = vadd.f32 %v518, %v584
      %v590 = vadd.f32 %v523, %v584
      %v591 = vadd.f32 %v528, %v584
      %v592 = vadd.f32 %v533, %v584
      %v593 = vadd.f32 %v538, %v584
      %v594 = vadd.f32 %v543, %v584
      %v595 = vadd.f32 %v548, %v584
      %v596 = vadd.f32 %v553, %v584
      %v597 = vadd.f32 %v558, %v584
      %v598 = vadd.f32 %v563, %v584
      %v599 = vadd.f32 %v568, %v584
      %v600 = vadd.f32 %v573, %v584
      %v601 = vadd.f32 %v578, %v584
      %v602 = vmul.f32 %v586, 0.5
      %v603 = vmul.f32 %v587, 0.5
      %v604 = vmul.f32 %v588, 0.5
      %v605 = vmul.f32 %v589, 0.5
      %v606 = vmul.f32 %v590, 0.5
      %v607 = vmul.f32 %v591, 0.5
      %v608 = vmul.f32 %v592, 0.5
      %v609 = vmul.f32 %v593, 0.5
      %v610 = vmul.f32 %v594, 0.5
      %v611 = vmul.f32 %v595, 0.5
      %v612 = vmul.f32 %v596, 0.5
      %v613 = vmul.f32 %v597, 0.5
      %v614 = vmul.f32 %v598, 0.5
      %v615 = vmul.f32 %v599, 0.5
      %v616 = vmul.f32 %v600, 0.5
      %v617 = vmul.f32 %v601, 0.5
      %v618 = vmul.f32 %v602, 0.001
      %v619 = vmul.f32 %v603, 0.001
      %v620 = vmul.f32 %v604, 0.001
      %v621 = vmul.f32 %v605, 0.001
      %v622 = vmul.f32 %v606, 0.001
      %v623 = vmul.f32 %v607, 0.001
      %v624 = vmul.f32 %v608, 0.001
      %v625 = vmul.f32 %v609, 0.001
      %v626 = vmul.f32 %v610, 0.001
      %v627 = vmul.f32 %v611, 0.001
      %v628 = vmul.f32 %v612, 0.001
      %v629 = vmul.f32 %v613, 0.001
      %v630 = vmul.f32 %v614, 0.001
      %v631 = vmul.f32 %v615, 0.001
      %v632 = vmul.f32 %v616, 0.001
      %v633 = vmul.f32 %v617, 0.001
      %v634 = vadd.f32 %v467, %v618
      %v635 = vadd.f32 %v468, %v619
      %v636 = vadd.f32 %v469, %v620
      %v637 = vadd.f32 %v470, %v621
      %v638 = vadd.f32 %v471, %v622
      %v639 = vadd.f32 %v472, %v623
      %v640 = vadd.f32 %v473, %v624
      %v641 = vadd.f32 %v474, %v625
      %v642 = vadd.f32 %v475, %v626
      %v643 = vadd.f32 %v476, %v627
      %v644 = vadd.f32 %v477, %v628
      %v645 = vadd.f32 %v478, %v629
      %v646 = vadd.f32 %v479, %v630
      %v647 = vadd.f32 %v480, %v631
      %v648 = vadd.f32 %v481, %v632
      %v649 = vadd.f32 %v482, %v633
      %651 = vset.pattern.permute.xlu0 0
      %652 = vperm.xlu0 %651, %v67
      %v653 = vpop.permute.xlu0 %652
      %656 = vset.pattern.permute.xlu0 0
      %657 = vperm.xlu0 %656, %v68
      %v658 = vpop.permute.xlu0 %657
      %661 = vset.pattern.permute.xlu0 0
      %662 = vperm.xlu0 %661, %v69
      %v663 = vpop.permute.xlu0 %662
      %666 = vset.pattern.permute.xlu0 0
      %667 = vperm.xlu0 %666, %v70
      %v668 = vpop.permute.xlu0 %667
      %671 = vset.pattern.permute.xlu0 0
      %672 = vperm.xlu0 %671, %v71
      %v673 = vpop.permute.xlu0 %672
      %676 = vset.pattern.permute.xlu0 0
      %677 = vperm.xlu0 %676, %v72
      %v678 = vpop.permute.xlu0 %677
      %681 = vset.pattern.permute.xlu0 0
      %682 = vperm.xlu0 %681, %v73
      %v683 = vpop.permute.xlu0 %682
      %686 = vset.pattern.permute.xlu0 0
      %687 = vperm.xlu0 %686, %v74
      %v688 = vpop.permute.xlu0 %687
      %691 = vset.pattern.permute.xlu0 0
      %692 = vperm.xlu0 %691, %v75
      %v693 = vpop.permute.xlu0 %692
      %696 = vset.pattern.permute.xlu0 0
      %697 = vperm.xlu0 %696, %v76
      %v698 = vpop.permute.xlu0 %697
      %701 = vset.pattern.permute.xlu0 0
      %702 = vperm.xlu0 %701, %v77
      %v703 = vpop.permute.xlu0 %702
      %706 = vset.pattern.permute.xlu0 0
      %707 = vperm.xlu0 %706, %v78
      %v708 = vpop.permute.xlu0 %707
      %711 = vset.pattern.permute.xlu0 0
      %712 = vperm.xlu0 %711, %v79
      %v713 = vpop.permute.xlu0 %712
      %716 = vset.pattern.permute.xlu0 0
      %717 = vperm.xlu0 %716, %v80
      %v718 = vpop.permute.xlu0 %717
      %721 = vset.pattern.permute.xlu0 0
      %722 = vperm.xlu0 %721, %v81
      %v723 = vpop.permute.xlu0 %722
      %726 = vset.pattern.permute.xlu0 0
      %727 = vperm.xlu0 %726, %v82
      %v728 = vpop.permute.xlu0 %727
      %v730 = vmul.f32 %v653, %v634
      %v731 = vmul.f32 %v658, %v635
      %v732 = vmul.f32 %v663, %v636
      %v733 = vmul.f32 %v668, %v637
      %v734 = vmul.f32 %v673, %v638
      %v735 = vmul.f32 %v678, %v639
      %v736 = vmul.f32 %v683, %v640
      %v737 = vmul.f32 %v688, %v641
      %v738 = vmul.f32 %v693, %v642
      %v739 = vmul.f32 %v698, %v643
      %v740 = vmul.f32 %v703, %v644
      %v741 = vmul.f32 %v708, %v645
      %v742 = vmul.f32 %v713, %v646
      %v743 = vmul.f32 %v718, %v647
      %v744 = vmul.f32 %v723, %v648
      %v745 = vmul.f32 %v728, %v649
      %v746 = vsel %vm205, %v730, 0.0
      %v747 = vsel %vm206, %v731, 0.0
      %v748 = vsel %vm207, %v732, 0.0
      %v749 = vsel %vm208, %v733, 0.0
      %v750 = vsel %vm209, %v734, 0.0
      %v751 = vsel %vm210, %v735, 0.0
      %v752 = vsel %vm211, %v736, 0.0
      %v753 = vsel %vm212, %v737, 0.0
      %v754 = vsel %vm213, %v738, 0.0
      %v755 = vsel %vm214, %v739, 0.0
      %v756 = vsel %vm215, %v740, 0.0
      %v757 = vsel %vm216, %v741, 0.0
      %v758 = vsel %vm217, %v742, 0.0
      %v759 = vsel %vm218, %v743, 0.0
      %v760 = vsel %vm219, %v744, 0.0
      %v761 = vsel %vm220, %v745, 0.0
      %v762 = vadd.f32 %v746, %v747
      %v763 = vadd.f32 %v762, %v748
      %v764 = vadd.f32 %v763, %v749
      %v765 = vadd.f32 %v764, %v750
      %v766 = vadd.f32 %v765, %v751
      %v767 = vadd.f32 %v766, %v752
      %v768 = vadd.f32 %v767, %v753
      %v769 = vadd.f32 %v768, %v754
      %v770 = vadd.f32 %v769, %v755
      %v771 = vadd.f32 %v770, %v756
      %v772 = vadd.f32 %v771, %v757
      %v773 = vadd.f32 %v772, %v758
      %v774 = vadd.f32 %v773, %v759
      %v775 = vadd.f32 %v774, %v760
      %v776 = vadd.f32 %v775, %v761
      %777 = vadd.xlane.f32.xlu0 %v776
      %v778 = vpop.xlane.xlu0 %777
      %v779 = vrot.slane %v778, 4
      %v780 = vadd.f32 %v778, %v779
      %v781 = vrot.slane %v780, 2
      %v782 = vadd.f32 %v780, %v781
      %v783 = vrot.slane %v782, 1
      %v784 = vadd.f32 %v782, %v783
      %s785 = vtos %v784
      %v786 = vld [vmem:[#allocation2] sm:$0xff]
      %v787 = vstv %s785
      %v788 = vadd.f32 %v786, %v787
      %789 = vst [vmem:[#allocation2] sm:$0xff] %v788
    $region29: #{tpu_custom_call.1} parent=1 // pred_fallthru
      _
    // Predicated region
    $region30: #{tpu_custom_call.1} parent=1 // pred_check
      _
    $region31: #{tpu_custom_call.1} parent=1 // pred_check_branch
      %791 = sbr.rel (0) target = $region33
    $region32: #{tpu_custom_call.1} parent=1 // pred_region
      %s793 = ssub.s32 128, 128
      %794 = vsyncadd [#allocation3], %s793
      %s796 = sshll.u32 [#allocation2], 4
      %s797 = int_to_ptr.vmem [resolvable:$true] %s796
      %799 = dma.vmem_to_hbm [thread:$0]  %s797, 128, %s5, [#allocation3]
    $region33: #{tpu_custom_call.1} parent=1 // pred_fallthru
      _
    // Predicated region
    $region34: #{tpu_custom_call.1} parent=1 // pred_check
      _
    $region35: #{tpu_custom_call.1} parent=1 // pred_check_branch
      %801 = sbr.rel (0) target = $region37
    $region36: #{tpu_custom_call.1} parent=1 // pred_region
      %802 = dma.done [#allocation3], 128
    $region37: #{tpu_custom_call.1} parent=1 // pred_fallthru
      _
    %803 = vsyncpa [#allocation3], 1

</llo_original>
